<compile_context>
chip_gen: v5e
topology: v5e:2x2
jax: 0.10.0
libtpu: 0.0.40
codegen_flags: <defaults>
</compile_context>

<pallas_src>
import functools
import math

import jax
import jax.numpy as jnp
from jax.experimental import pallas as pl
from jax.experimental.pallas import tpu as pltpu


# ----------------------------------------------------------------------------
# Fused kernel: 3x3 conv (+bias) -> RMSNorm -> scale_shift -> SiLU
# ----------------------------------------------------------------------------
def _block_kernel(x_ref, w_ref, b_ref, m_ref, *rest, wp, ntok, apply_shift):
    """One batch element per grid step (channels-first, flat spatial tokens).

    x_ref : (1, C_in, T)        zero-padded input tokens, bf16.
                                T = (H+3)*(W+2); token q = row*Wp + col.
    w_ref : (9, C_out, C_in)    conv weight per tap (bf16), tap = ky*3 + kx
    b_ref : (C_out, 1)          conv bias (f32)
    m_ref : (1or B, C_out, 1)   folded multiplier g*sqrt(C_out)*(scale+1) (f32)
    rest  : [shift_ref (1, C_out, 1)] if apply_shift, then o_ref (1, C_out, Ntok)
    """
    if apply_shift:
        sh_ref, o_ref = rest
    else:
        (o_ref,) = rest

    c_out = o_ref.shape[1]

    # Whole padded token slab for this image (bf16, cast already done in wrapper).
    xflat = x_ref[0]                                    # (C_in, T)

    # 3x3 conv as 9 shifted matmuls over the flat token axis.  Each tap's
    # operand is a contiguous lane window of xflat (no gather / reshape);
    # output tokens at padded columns >= W are garbage and dropped later.
    acc = jnp.zeros((c_out, ntok), jnp.float32)
    for ky in range(3):
        for kx in range(3):
            off = ky * wp + kx                          # static Python offset
            window = xflat[:, off:off + ntok]           # (C_in, Ntok) bf16
            acc = acc + jnp.dot(w_ref[ky * 3 + kx], window,
                                preferred_element_type=jnp.float32)
    acc = acc + b_ref[...]                              # conv bias, (C_out,1) bcast

    # RMSNorm over channels (sublane axis), stats in f32; rsqrt -> EUP slot.
    sumsq = jnp.sum(acc * acc, axis=0, keepdims=True)   # (1, Ntok)
    inv = jax.lax.rsqrt(jnp.maximum(sumsq, 1e-24))      # == 1 / max(||x||_2, 1e-12)

    # Folded epilogue: y = acc * inv * [g*sqrt(C_out)*(scale+1)] (+ shift)
    y = acc * inv * m_ref[0]
    if apply_shift:
        y = y + sh_ref[0]

    # SiLU
    y = y * jax.nn.sigmoid(y)

    # TODO(synk): nn.Dropout(p=0.0) / eval-mode dropout is an identity;
    # training-mode dropout with p > 0 is not implemented.
    o_ref[0] = y.astype(o_ref.dtype)


# ----------------------------------------------------------------------------
# Wrapper
# ----------------------------------------------------------------------------
def block_forward(x, params, scale_shift=None, out_dtype=jnp.float32):
    """x: (B, C_in, H, W) float32 NCHW.  Returns (B, C_out, H, W) out_dtype.

    Set out_dtype=jnp.bfloat16 if the downstream layer accepts bf16 (halves
    the output HBM write + output double buffer).
    """
    B, C_in, H, W = x.shape
    w_taps = params["w_taps"]                           # (9, C_out, C_in) bf16
    C_out = w_taps.shape[1]

    Wp = W + 2                                          # padded width
    T = (H + 3) * Wp                                    # padded tokens (+2 bottom rows)
    Ntok = H * Wp                                       # computed output tokens

    # Zero-pad (1 top, 2 bottom rows; 1 left, 1 right col), flatten spatial to
    # tokens, cast bf16 once.  One fused XLA pass, no transposes.
    xp = jnp.pad(x, ((0, 0), (0, 0), (1, 2), (1, 1)))
    xp = xp.reshape(B, C_in, T).astype(jnp.bfloat16)

    gs = params["gs"]                                   # (C_out, 1) = g * sqrt(C_out)
    b_conv = params["b_conv"]                           # (C_out, 1)

    if scale_shift is None:
        # Specialized path: single batch-independent multiplier, no shift refs.
        m = gs.reshape(1, C_out, 1)
        apply_shift = False
        extra_in = ()
        extra_specs = ()
    else:
        scale, shift = scale_shift                      # (B, C_out, 1, 1) or (B, C_out)
        scale = scale.reshape(B, C_out, 1).astype(jnp.float32)
        shift = shift.reshape(B, C_out, 1).astype(jnp.float32)
        m = gs.reshape(1, C_out, 1) * (scale + 1.0)     # fold RMSNorm gain with (scale+1)
        apply_shift = True
        extra_in = (shift,)
        extra_specs = (pl.BlockSpec((1, C_out, 1), lambda b: (b, 0, 0)),)

    m_bdim = m.shape[0]
    m_spec = pl.BlockSpec(
        (1, C_out, 1),
        (lambda b: (b, 0, 0)) if m_bdim > 1 else (lambda b: (0, 0, 0)))

    # VMEM budget from actual tile sizes (double-buffered I/O + weights +
    # in-kernel working set) with headroom; never hard-code the physical cap.
    out_isize = jnp.dtype(out_dtype).itemsize
    in_block = C_in * T * 2
    out_block = C_out * Ntok * out_isize
    param_bytes = 9 * C_out * C_in * 2 + 4 * C_out * 4
    work_bytes = C_in * Ntok * 2 + 2 * C_out * Ntok * 4
    vmem_limit = int(max(2 * (in_block + out_block) + param_bytes + work_bytes
                         + (4 << 20), 16 << 20))

    kernel = functools.partial(_block_kernel, wp=Wp, ntok=Ntok,
                               apply_shift=apply_shift)

    out_tok = pl.pallas_call(
        kernel,
        out_shape=jax.ShapeDtypeStruct((B, C_out, Ntok), out_dtype),
        grid=(B,),
        in_specs=[
            pl.BlockSpec((1, C_in, T), lambda b: (b, 0, 0)),
            pl.BlockSpec((9, C_out, C_in), lambda b: (0, 0, 0)),
            pl.BlockSpec((C_out, 1), lambda b: (0, 0)),
            m_spec,
            *extra_specs,
        ],
        out_specs=pl.BlockSpec((1, C_out, Ntok), lambda b: (b, 0, 0)),
        compiler_params=pltpu.CompilerParams(
            dimension_semantics=("parallel",),
            vmem_limit_bytes=vmem_limit,
        ),
    )(xp, w_taps, b_conv, m, *extra_in)

    # (B, C_out, H*Wp) -> (B, C_out, H, W): drop the 2 right-pad columns per row.
    return out_tok.reshape(B, C_out, H, Wp)[:, :, :, :W]


# ----------------------------------------------------------------------------
# Deterministic parameter init (shapes match Block.__init__)
# ----------------------------------------------------------------------------
def init_params(key, dim, dim_out):
    k1, k2 = jax.random.split(key)
    # nn.Conv2d(dim, dim_out, 3, padding=1): weight (dim_out, dim, 3, 3), bias (dim_out,)
    w_conv = jax.random.normal(k1, (dim_out, dim, 3, 3), jnp.float32) / math.sqrt(dim * 9)
    b_conv = jax.random.normal(k2, (dim_out,), jnp.float32) * 0.05
    g = jnp.ones((dim_out,), jnp.float32)               # RMSNorm.g

    # Kernel-friendly precomputed forms:
    #   w_taps[ky*3+kx] = w_conv[:, :, ky, kx] -> (C_out, C_in), bf16 for MXU
    #   gs = g * sqrt(dim_out)                 -> RMSNorm scale folded into g
    w_taps = jnp.transpose(w_conv, (2, 3, 0, 1)).reshape(9, dim_out, dim)
    return {
        "w_taps": w_taps.astype(jnp.bfloat16),
        "b_conv": b_conv.reshape(dim_out, 1),
        "gs": (g * (float(dim_out) ** 0.5)).reshape(dim_out, 1),
        "w_conv": w_conv,                                # kept for the reference check
    }


# ----------------------------------------------------------------------------
# Pure-JAX reference (numerical sanity check; conv in f32, kernel uses bf16
# MXU operands with f32 accumulation -> 5e-2 tolerance)
# ----------------------------------------------------------------------------
def block_reference(x, params, scale_shift=None):
    w = params["w_conv"]                                 # (C_out, C_in, 3, 3)
    b = params["b_conv"].reshape(-1)
    y = jax.lax.conv_general_dilated(
        x, w, window_strides=(1, 1), padding="SAME",
        dimension_numbers=("NCHW", "OIHW", "NCHW"))
    y = y + b[None, :, None, None]
    nrm = jnp.sqrt(jnp.sum(y * y, axis=1, keepdims=True))
    y = y / jnp.maximum(nrm, 1e-12)
    y = y * params["gs"].reshape(1, -1, 1, 1)
    if scale_shift is not None:
        scale, shift = scale_shift
        y = y * (scale + 1.0) + shift
    return y * jax.nn.sigmoid(y)


if __name__ == "__main__":
    dim, dim_out = 4, 8
    B, Hs, Ws = 2, 16, 16

    key = jax.random.PRNGKey(0)
    kx_, kp, ks1, ks2 = jax.random.split(key, 4)
    x = jax.random.normal(kx_, (B, dim, Hs, Ws), jnp.float32)
    params = init_params(kp, dim, dim_out)

    fwd = jax.jit(block_forward)

    # Path 1: no scale_shift (specialized kernel variant)
    out = fwd(x, params)
    jax.block_until_ready(out)
    assert out.shape == (B, dim_out, Hs, Ws)
    assert bool(jnp.all(jnp.isfinite(out)))
    ref = block_reference(x, params)
    assert bool(jnp.allclose(out, ref, rtol=5e-2, atol=5e-2)), \
        float(jnp.max(jnp.abs(out - ref)))

    # Path 2: with scale_shift (folded multiplier + shift)
    scale = 0.1 * jax.random.normal(ks1, (B, dim_out, 1, 1), jnp.float32)
    shift = 0.1 * jax.random.normal(ks2, (B, dim_out, 1, 1), jnp.float32)
    out2 = fwd(x, params, (scale, shift))
    jax.block_until_ready(out2)
    ref2 = block_reference(x, params, (scale, shift))
    assert bool(jnp.allclose(out2, ref2, rtol=5e-2, atol=5e-2)), \
        float(jnp.max(jnp.abs(out2 - ref2)))

    print("KERNEL_OK")
</pallas_src>

<mosaic_0001>
module attributes {stable_mosaic.version = 11 : i64} {
  func.func @_block_kernel(%arg0: i32, %arg1: memref<1x4x342xbf16, #tpu.memory_space<vmem>>, %arg2: memref<9x8x4xbf16, #tpu.memory_space<vmem>>, %arg3: memref<8x1xf32, #tpu.memory_space<vmem>>, %arg4: memref<1x8x1xf32, #tpu.memory_space<vmem>>, %arg5: memref<1x8x288xf32, #tpu.memory_space<vmem>>) attributes {dimension_semantics = [#tpu.dimension_semantics<parallel>], iteration_bounds = array<i64: 2>, scalar_prefetch = 0 : i64, scratch_operands = 0 : i64, tpu.core_type = #tpu.core_type<tc>, window_params = [{transform_indices = @transform_0, window_bounds = array<i64: 1, 4, 342>}, {pipeline_mode = #tpu.pipeline_mode<synchronous>, transform_indices = @transform_1, window_bounds = array<i64: 9, 8, 4>}, {pipeline_mode = #tpu.pipeline_mode<synchronous>, transform_indices = @transform_2, window_bounds = array<i64: 8, 1>}, {pipeline_mode = #tpu.pipeline_mode<synchronous>, transform_indices = @transform_3, window_bounds = array<i64: 1, 8, 1>}, {transform_indices = @transform_4, window_bounds = array<i64: 1, 8, 288>}]} {
    %c0 = arith.constant 0 : index
    %c0_0 = arith.constant 0 : index
    %c0_1 = arith.constant 0 : index
    %0 = vector.load %arg1[%c0, %c0_0, %c0_1] : memref<1x4x342xbf16, #tpu.memory_space<vmem>>, vector<1x4x342xbf16>
    %1 = vector.shape_cast %0 : vector<1x4x342xbf16> to vector<4x342xbf16>
    %cst = arith.constant 0.000000e+00 : f32
    %2 = vector.broadcast %cst : f32 to vector<8x288xf32>
    %3 = vector.extract_strided_slice %1 {offsets = [0, 0], sizes = [4, 288], strides = [1, 1]} : vector<4x342xbf16> to vector<4x288xbf16>
    %c0_2 = arith.constant 0 : index
    %c0_3 = arith.constant 0 : index
    %c0_4 = arith.constant 0 : index
    %4 = vector.load %arg2[%c0_2, %c0_3, %c0_4] : memref<9x8x4xbf16, #tpu.memory_space<vmem>>, vector<1x8x4xbf16>
    %5 = vector.shape_cast %4 : vector<1x8x4xbf16> to vector<8x4xbf16>
    %cst_5 = arith.constant dense<0.000000e+00> : vector<8x288xf32>
    %6 = tpu.matmul %5, %3, %cst_5 {dimension_numbers = #tpu.dot_dimension_numbers<[1], [0], [0], [1], [0, 0, 1, 1], [], []>} : vector<8x4xbf16>, vector<4x288xbf16>, vector<8x288xf32> -> vector<8x288xf32>
    %7 = arith.addf %2, %6 : vector<8x288xf32>
    %8 = vector.extract_strided_slice %1 {offsets = [0, 1], sizes = [4, 288], strides = [1, 1]} : vector<4x342xbf16> to vector<4x288xbf16>
    %c1 = arith.constant 1 : index
    %c0_6 = arith.constant 0 : index
    %c0_7 = arith.constant 0 : index
    %9 = vector.load %arg2[%c1, %c0_6, %c0_7] : memref<9x8x4xbf16, #tpu.memory_space<vmem>>, vector<1x8x4xbf16>
    %10 = vector.shape_cast %9 : vector<1x8x4xbf16> to vector<8x4xbf16>
    %cst_8 = arith.constant dense<0.000000e+00> : vector<8x288xf32>
    %11 = tpu.matmul %10, %8, %cst_8 {dimension_numbers = #tpu.dot_dimension_numbers<[1], [0], [0], [1], [0, 0, 1, 1], [], []>} : vector<8x4xbf16>, vector<4x288xbf16>, vector<8x288xf32> -> vector<8x288xf32>
    %12 = arith.addf %7, %11 : vector<8x288xf32>
    %13 = vector.extract_strided_slice %1 {offsets = [0, 2], sizes = [4, 288], strides = [1, 1]} : vector<4x342xbf16> to vector<4x288xbf16>
    %c2 = arith.constant 2 : index
    %c0_9 = arith.constant 0 : index
    %c0_10 = arith.constant 0 : index
    %14 = vector.load %arg2[%c2, %c0_9, %c0_10] : memref<9x8x4xbf16, #tpu.memory_space<vmem>>, vector<1x8x4xbf16>
    %15 = vector.shape_cast %14 : vector<1x8x4xbf16> to vector<8x4xbf16>
    %cst_11 = arith.constant dense<0.000000e+00> : vector<8x288xf32>
    %16 = tpu.matmul %15, %13, %cst_11 {dimension_numbers = #tpu.dot_dimension_numbers<[1], [0], [0], [1], [0, 0, 1, 1], [], []>} : vector<8x4xbf16>, vector<4x288xbf16>, vector<8x288xf32> -> vector<8x288xf32>
    %17 = arith.addf %12, %16 : vector<8x288xf32>
    %18 = vector.extract_strided_slice %1 {offsets = [0, 18], sizes = [4, 288], strides = [1, 1]} : vector<4x342xbf16> to vector<4x288xbf16>
    %c3 = arith.constant 3 : index
    %c0_12 = arith.constant 0 : index
    %c0_13 = arith.constant 0 : index
    %19 = vector.load %arg2[%c3, %c0_12, %c0_13] : memref<9x8x4xbf16, #tpu.memory_space<vmem>>, vector<1x8x4xbf16>
    %20 = vector.shape_cast %19 : vector<1x8x4xbf16> to vector<8x4xbf16>
    %cst_14 = arith.constant dense<0.000000e+00> : vector<8x288xf32>
    %21 = tpu.matmul %20, %18, %cst_14 {dimension_numbers = #tpu.dot_dimension_numbers<[1], [0], [0], [1], [0, 0, 1, 1], [], []>} : vector<8x4xbf16>, vector<4x288xbf16>, vector<8x288xf32> -> vector<8x288xf32>
    %22 = arith.addf %17, %21 : vector<8x288xf32>
    %23 = vector.extract_strided_slice %1 {offsets = [0, 19], sizes = [4, 288], strides = [1, 1]} : vector<4x342xbf16> to vector<4x288xbf16>
    %c4 = arith.constant 4 : index
    %c0_15 = arith.constant 0 : index
    %c0_16 = arith.constant 0 : index
    %24 = vector.load %arg2[%c4, %c0_15, %c0_16] : memref<9x8x4xbf16, #tpu.memory_space<vmem>>, vector<1x8x4xbf16>
    %25 = vector.shape_cast %24 : vector<1x8x4xbf16> to vector<8x4xbf16>
    %cst_17 = arith.constant dense<0.000000e+00> : vector<8x288xf32>
    %26 = tpu.matmul %25, %23, %cst_17 {dimension_numbers = #tpu.dot_dimension_numbers<[1], [0], [0], [1], [0, 0, 1, 1], [], []>} : vector<8x4xbf16>, vector<4x288xbf16>, vector<8x288xf32> -> vector<8x288xf32>
    %27 = arith.addf %22, %26 : vector<8x288xf32>
    %28 = vector.extract_strided_slice %1 {offsets = [0, 20], sizes = [4, 288], strides = [1, 1]} : vector<4x342xbf16> to vector<4x288xbf16>
    %c5 = arith.constant 5 : index
    %c0_18 = arith.constant 0 : index
    %c0_19 = arith.constant 0 : index
    %29 = vector.load %arg2[%c5, %c0_18, %c0_19] : memref<9x8x4xbf16, #tpu.memory_space<vmem>>, vector<1x8x4xbf16>
    %30 = vector.shape_cast %29 : vector<1x8x4xbf16> to vector<8x4xbf16>
    %cst_20 = arith.constant dense<0.000000e+00> : vector<8x288xf32>
    %31 = tpu.matmul %30, %28, %cst_20 {dimension_numbers = #tpu.dot_dimension_numbers<[1], [0], [0], [1], [0, 0, 1, 1], [], []>} : vector<8x4xbf16>, vector<4x288xbf16>, vector<8x288xf32> -> vector<8x288xf32>
    %32 = arith.addf %27, %31 : vector<8x288xf32>
    %33 = vector.extract_strided_slice %1 {offsets = [0, 36], sizes = [4, 288], strides = [1, 1]} : vector<4x342xbf16> to vector<4x288xbf16>
    %c6 = arith.constant 6 : index
    %c0_21 = arith.constant 0 : index
    %c0_22 = arith.constant 0 : index
    %34 = vector.load %arg2[%c6, %c0_21, %c0_22] : memref<9x8x4xbf16, #tpu.memory_space<vmem>>, vector<1x8x4xbf16>
    %35 = vector.shape_cast %34 : vector<1x8x4xbf16> to vector<8x4xbf16>
    %cst_23 = arith.constant dense<0.000000e+00> : vector<8x288xf32>
    %36 = tpu.matmul %35, %33, %cst_23 {dimension_numbers = #tpu.dot_dimension_numbers<[1], [0], [0], [1], [0, 0, 1, 1], [], []>} : vector<8x4xbf16>, vector<4x288xbf16>, vector<8x288xf32> -> vector<8x288xf32>
    %37 = arith.addf %32, %36 : vector<8x288xf32>
    %38 = vector.extract_strided_slice %1 {offsets = [0, 37], sizes = [4, 288], strides = [1, 1]} : vector<4x342xbf16> to vector<4x288xbf16>
    %c7 = arith.constant 7 : index
    %c0_24 = arith.constant 0 : index
    %c0_25 = arith.constant 0 : index
    %39 = vector.load %arg2[%c7, %c0_24, %c0_25] : memref<9x8x4xbf16, #tpu.memory_space<vmem>>, vector<1x8x4xbf16>
    %40 = vector.shape_cast %39 : vector<1x8x4xbf16> to vector<8x4xbf16>
    %cst_26 = arith.constant dense<0.000000e+00> : vector<8x288xf32>
    %41 = tpu.matmul %40, %38, %cst_26 {dimension_numbers = #tpu.dot_dimension_numbers<[1], [0], [0], [1], [0, 0, 1, 1], [], []>} : vector<8x4xbf16>, vector<4x288xbf16>, vector<8x288xf32> -> vector<8x288xf32>
    %42 = arith.addf %37, %41 : vector<8x288xf32>
    %43 = vector.extract_strided_slice %1 {offsets = [0, 38], sizes = [4, 288], strides = [1, 1]} : vector<4x342xbf16> to vector<4x288xbf16>
    %c8 = arith.constant 8 : index
    %c0_27 = arith.constant 0 : index
    %c0_28 = arith.constant 0 : index
    %44 = vector.load %arg2[%c8, %c0_27, %c0_28] : memref<9x8x4xbf16, #tpu.memory_space<vmem>>, vector<1x8x4xbf16>
    %45 = vector.shape_cast %44 : vector<1x8x4xbf16> to vector<8x4xbf16>
    %cst_29 = arith.constant dense<0.000000e+00> : vector<8x288xf32>
    %46 = tpu.matmul %45, %43, %cst_29 {dimension_numbers = #tpu.dot_dimension_numbers<[1], [0], [0], [1], [0, 0, 1, 1], [], []>} : vector<8x4xbf16>, vector<4x288xbf16>, vector<8x288xf32> -> vector<8x288xf32>
    %47 = arith.addf %42, %46 : vector<8x288xf32>
    %c0_30 = arith.constant 0 : index
    %c0_31 = arith.constant 0 : index
    %48 = vector.load %arg3[%c0_30, %c0_31] : memref<8x1xf32, #tpu.memory_space<vmem>>, vector<8x1xf32>
    %49 = vector.broadcast %48 : vector<8x1xf32> to vector<8x288xf32>
    %50 = arith.addf %47, %49 : vector<8x288xf32>
    %51 = arith.mulf %50, %50 : vector<8x288xf32>
    %cst_32 = arith.constant dense<0.000000e+00> : vector<288xf32>
    %52 = vector.multi_reduction <add>, %51, %cst_32 [0] : vector<8x288xf32> to vector<288xf32>
    %53 = vector.shape_cast %52 : vector<288xf32> to vector<1x288xf32>
    %cst_33 = arith.constant 1.000000e-24 : f32
    %54 = vector.broadcast %cst_33 : f32 to vector<1x288xf32>
    %55 = arith.maximumf %53, %54 : vector<1x288xf32>
    %56 = math.rsqrt %55 : vector<1x288xf32>
    %57 = vector.broadcast %56 : vector<1x288xf32> to vector<8x288xf32>
    %58 = arith.mulf %50, %57 : vector<8x288xf32>
    %c0_34 = arith.constant 0 : index
    %c0_35 = arith.constant 0 : index
    %c0_36 = arith.constant 0 : index
    %59 = vector.load %arg4[%c0_34, %c0_35, %c0_36] : memref<1x8x1xf32, #tpu.memory_space<vmem>>, vector<1x8x1xf32>
    %60 = vector.shape_cast %59 : vector<1x8x1xf32> to vector<8x1xf32>
    %61 = vector.broadcast %60 : vector<8x1xf32> to vector<8x288xf32>
    %62 = arith.mulf %58, %61 : vector<8x288xf32>
    %63 = arith.negf %62 : vector<8x288xf32>
    %64 = math.exp %63 : vector<8x288xf32>
    %cst_37 = arith.constant 1.000000e+00 : f32
    %65 = vector.broadcast %cst_37 : f32 to vector<8x288xf32>
    %66 = arith.addf %65, %64 : vector<8x288xf32>
    %67 = arith.divf %65, %66 : vector<8x288xf32>
    %68 = arith.mulf %62, %67 : vector<8x288xf32>
    %c0_38 = arith.constant 0 : index
    %c0_39 = arith.constant 0 : index
    %c0_40 = arith.constant 0 : index
    %69 = vector.load %arg5[%c0_38, %c0_39, %c0_40] : memref<1x8x288xf32, #tpu.memory_space<vmem>>, vector<1x8x288xf32>
    %70 = vector.shape_cast %69 : vector<1x8x288xf32> to vector<8x288xf32>
    %71 = vector.shape_cast %68 : vector<8x288xf32> to vector<1x8x288xf32>
    tpu.vector_store %arg5[%c0_38, %c0_39, %c0_40], %71 {strides = array<i32>} : memref<1x8x288xf32, #tpu.memory_space<vmem>>, vector<1x8x288xf32>,
    return
  }
  func.func @transform_0(%arg0: i32) -> (i32, i32, i32) {
    %c0_i32 = arith.constant 0 : i32
    %c0_i32_0 = arith.constant 0 : i32
    %c0_i32_1 = arith.constant 0 : i32
    return %arg0, %c0_i32, %c0_i32_0 : i32, i32, i32
  }
  func.func @transform_1(%arg0: i32) -> (i32, i32, i32) {
    %c0_i32 = arith.constant 0 : i32
    %c0_i32_0 = arith.constant 0 : i32
    %c0_i32_1 = arith.constant 0 : i32
    %c0_i32_2 = arith.constant 0 : i32
    return %c0_i32, %c0_i32_0, %c0_i32_1 : i32, i32, i32
  }
  func.func @transform_2(%arg0: i32) -> (i32, i32) {
    %c0_i32 = arith.constant 0 : i32
    %c0_i32_0 = arith.constant 0 : i32
    %c0_i32_1 = arith.constant 0 : i32
    return %c0_i32, %c0_i32_0 : i32, i32
  }
  func.func @transform_3(%arg0: i32) -> (i32, i32, i32) {
    %c0_i32 = arith.constant 0 : i32
    %c0_i32_0 = arith.constant 0 : i32
    %c0_i32_1 = arith.constant 0 : i32
    %c0_i32_2 = arith.constant 0 : i32
    return %c0_i32, %c0_i32_0, %c0_i32_1 : i32, i32, i32
  }
  func.func @transform_4(%arg0: i32) -> (i32, i32, i32) {
    %c0_i32 = arith.constant 0 : i32
    %c0_i32_0 = arith.constant 0 : i32
    %c0_i32_1 = arith.constant 0 : i32
    return %arg0, %c0_i32, %c0_i32_0 : i32, i32, i32
  }
}

</mosaic_0001>

<llo_original>
// kernel: block_forward.1
$region0: #{block_forward.1}
  #allocation0 [shape = 'u32[]', space=smem, size = 0x4, offset = 0x4, fixed_abs, tag = 'smem constant byte address 0x4 - core index']
  #allocation1 [shape = 'u32[72,128]{1,0:T(1,128)}', space=vmem, size = 0x9000, scoped, tag = 'internal scratch']
  %s0 = inlined_call_operand.vmem [shape: bf16[2,4,342], index: 0, kind: input, shape index: {}]
  %s1 = inlined_call_operand.vmem [shape: bf16[9,8,4], index: 1, kind: input, shape index: {}]
  %s2 = inlined_call_operand.vmem [shape: f32[8,1], index: 2, kind: input, shape index: {}]
  %s3 = inlined_call_operand.vmem [shape: f32[1,8,1], index: 3, kind: input, shape index: {}]
  %s4 = inlined_call_operand.vmem [shape: f32[2,8,288], index: 4, kind: output, shape index: {}]
  %s5 = sld [smem:[#allocation0]]
  $region49: #{block_forward.1} parent=0
    _
  %s7 = ssub.s32 1, %s5
  %s8 = scalar_select 0, %s7, %s5
  loop: start=0, step=1, limit=4
  $region2: #{block_forward.1} parent=0 // loop_pre_header
    _
  $region3: #{block_forward.1} parent=0 // loop_header
    %s10 = sphi 0, %s14
    %p11 = scmp.ge.s32.totalorder %s10, 4
    %s20 = sphi 0, %s22
    %s23 = sphi 0, %s20
    %s24 = sphi 0, %s23
    %s40 = sphi 0, %s24
    %s44 = sphi 0, %s44
    %s46 = sphi 0, %s44
    %s47 = sphi 0, %s46
    %s61 = sphi 0, %s47
    %s65 = sphi 0, %s65
    %s67 = sphi 0, %s65
    %s68 = sphi 0, %s67
    %s82 = sphi 0, %s68
    %s86 = sphi 0, %s86
    %s88 = sphi 0, %s86
    %s89 = sphi 0, %s88
    %s103 = sphi 0, %s89
    %s109 = sphi 0, %s111
    %s112 = sphi 0, %s109
    %s113 = sphi 0, %s112
    %s129 = sphi 0, %s113
  $region4: #{block_forward.1} parent=0 // loop_header_branch
    %13 = sbr.rel (%p11) target = $region8
  $region5: #{block_forward.1} parent=0 // loop_body
    %s15 = ssub.s32 %s10, 1
    %s16 = ssub.s32 %s10, 2
    %s17 = sadd.s32 %s10, 1
    %s18 = ssub.s32 %s10, %s17
    %p19 = scmp.eq.s32.totalorder %s18, 0
    %s21 = sadd.s32 %s20, 1
    %s22 = scalar_select %p19, %s20, %s21
    %p25 = pneg %p19
    %p26 = scmp.eq.s32.totalorder %s10, 1
    %p27 = por %p25, %p26
    %p28 = scmp.ne.s32.totalorder %s20, %s23
    %p29 = scmp.eq.s32.totalorder %s10, 0
    %p30 = por %p28, %p29
    %p31 = scmp.ne.s32.totalorder %s20, %s23
    %p32 = scmp.eq.s32.totalorder %s15, 1
    %p33 = por %p31, %p32
    %p34 = scmp.ne.s32.totalorder %s23, %s24
    %p35 = scmp.eq.s32.totalorder %s15, 0
    %p36 = por %p34, %p35
    %p37 = scmp.ne.s32.totalorder %s23, %s24
    %p38 = scmp.eq.s32.totalorder %s16, 1
    %p39 = por %p37, %p38
    %p41 = scmp.ne.s32.totalorder %s24, %s40
    %p42 = scmp.eq.s32.totalorder %s16, 0
    %p43 = por %p41, %p42
    %s45 = sadd.s32 %s44, 1
    %p48 = scmp.eq.s32.totalorder %s10, 1
    %p49 = scmp.ne.s32.totalorder %s44, %s46
    %p50 = scmp.eq.s32.totalorder %s10, 0
    %p51 = por %p49, %p50
    %p52 = scmp.ne.s32.totalorder %s44, %s46
    %p53 = scmp.eq.s32.totalorder %s15, 1
    %p54 = por %p52, %p53
    %p55 = scmp.ne.s32.totalorder %s46, %s47
    %p56 = scmp.eq.s32.totalorder %s15, 0
    %p57 = por %p55, %p56
    %p58 = scmp.ne.s32.totalorder %s46, %s47
    %p59 = scmp.eq.s32.totalorder %s16, 1
    %p60 = por %p58, %p59
    %p62 = scmp.ne.s32.totalorder %s47, %s61
    %p63 = scmp.eq.s32.totalorder %s16, 0
    %p64 = por %p62, %p63
    %s66 = sadd.s32 %s65, 1
    %p69 = scmp.eq.s32.totalorder %s10, 1
    %p70 = scmp.ne.s32.totalorder %s65, %s67
    %p71 = scmp.eq.s32.totalorder %s10, 0
    %p72 = por %p70, %p71
    %p73 = scmp.ne.s32.totalorder %s65, %s67
    %p74 = scmp.eq.s32.totalorder %s15, 1
    %p75 = por %p73, %p74
    %p76 = scmp.ne.s32.totalorder %s67, %s68
    %p77 = scmp.eq.s32.totalorder %s15, 0
    %p78 = por %p76, %p77
    %p79 = scmp.ne.s32.totalorder %s67, %s68
    %p80 = scmp.eq.s32.totalorder %s16, 1
    %p81 = por %p79, %p80
    %p83 = scmp.ne.s32.totalorder %s68, %s82
    %p84 = scmp.eq.s32.totalorder %s16, 0
    %p85 = por %p83, %p84
    %s87 = sadd.s32 %s86, 1
    %p90 = scmp.eq.s32.totalorder %s10, 1
    %p91 = scmp.ne.s32.totalorder %s86, %s88
    %p92 = scmp.eq.s32.totalorder %s10, 0
    %p93 = por %p91, %p92
    %p94 = scmp.ne.s32.totalorder %s86, %s88
    %p95 = scmp.eq.s32.totalorder %s15, 1
    %p96 = por %p94, %p95
    %p97 = scmp.ne.s32.totalorder %s88, %s89
    %p98 = scmp.eq.s32.totalorder %s15, 0
    %p99 = por %p97, %p98
    %p100 = scmp.ne.s32.totalorder %s88, %s89
    %p101 = scmp.eq.s32.totalorder %s16, 1
    %p102 = por %p100, %p101
    %p104 = scmp.ne.s32.totalorder %s89, %s103
    %p105 = scmp.eq.s32.totalorder %s16, 0
    %p106 = por %p104, %p105
    %s107 = ssub.s32 %s10, %s17
    %p108 = scmp.eq.s32.totalorder %s107, 0
    %s110 = sadd.s32 %s109, 1
    %s111 = scalar_select %p108, %s109, %s110
    %p114 = pneg %p108
    %p115 = scmp.eq.s32.totalorder %s10, 1
    %p116 = por %p114, %p115
    %p117 = scmp.ne.s32.totalorder %s109, %s112
    %p118 = scmp.eq.s32.totalorder %s10, 0
    %p119 = por %p117, %p118
    %p120 = scmp.ne.s32.totalorder %s109, %s112
    %p121 = scmp.eq.s32.totalorder %s15, 1
    %p122 = por %p120, %p121
    %p123 = scmp.ne.s32.totalorder %s112, %s113
    %p124 = scmp.eq.s32.totalorder %s15, 0
    %p125 = por %p123, %p124
    %p126 = scmp.ne.s32.totalorder %s112, %s113
    %p127 = scmp.eq.s32.totalorder %s16, 1
    %p128 = por %p126, %p127
    %p130 = scmp.ne.s32.totalorder %s113, %s129
    %p131 = scmp.eq.s32.totalorder %s16, 0
    %p132 = por %p130, %p131
    %p133 = scmp.le.s32.totalorder 1, %s10
    %p134 = scmp.lt.s32.totalorder %s10, 3
    %p135 = pnand %p133, %p134
    %p136 = pneg %p135
    // Predicated region
    $region9: #{block_forward.1} parent=5 // pred_check
      _
    $region10: #{block_forward.1} parent=5 // pred_check_branch
      %138 = sbr.rel (%p135) target = $region12
    $region11: #{block_forward.1} parent=5 // pred_region
      %s139 = ssub.s32 %s10, 1
      // Predicated region
      $region13: #{block_forward.1} parent=11 // pred_check
        %p140 = pneg %p57
      $region14: #{block_forward.1} parent=11 // pred_check_branch
        %142 = sbr.rel (%p140) target = $region16
      $region15: #{block_forward.1} parent=11 // pred_region
        _
      $region16: #{block_forward.1} parent=11 // pred_fallthru
        _
      // Predicated region
      $region17: #{block_forward.1} parent=11 // pred_check
        %p143 = pneg %p78
      $region18: #{block_forward.1} parent=11 // pred_check_branch
        %145 = sbr.rel (%p143) target = $region20
      $region19: #{block_forward.1} parent=11 // pred_region
        _
      $region20: #{block_forward.1} parent=11 // pred_fallthru
        _
      // Predicated region
      $region21: #{block_forward.1} parent=11 // pred_check
        %p146 = pneg %p99
      $region22: #{block_forward.1} parent=11 // pred_check_branch
        %148 = sbr.rel (%p146) target = $region24
      $region23: #{block_forward.1} parent=11 // pred_region
        _
      $region24: #{block_forward.1} parent=11 // pred_fallthru
        _
    $region12: #{block_forward.1} parent=5 // pred_fallthru
      _
    %p149 = scmp.lt.s32.totalorder %s10, 2
    // Predicated region
    $region25: #{block_forward.1} parent=5 // pred_check
      %p150 = pneg %p149
    $region26: #{block_forward.1} parent=5 // pred_check_branch
      %152 = sbr.rel (%p150) target = $region28
    $region27: #{block_forward.1} parent=5 // pred_region
      // Predicated region
      $region29: #{block_forward.1} parent=27 // pred_check
        %p153 = pneg %p30
      $region30: #{block_forward.1} parent=27 // pred_check_branch
        %155 = sbr.rel (%p153) target = $region32
      $region31: #{block_forward.1} parent=27 // pred_region
        %p156 = scmp.lt.s32.totalorder %s10, 1
        %s157 = scalar_select %p156, %s10, 1
        %s158 = smul.addr %s157, 3
        %s159 = smul.addr %s158, 2
        %s160 = scalar_lea.vmem %s0, %s159
      $region32: #{block_forward.1} parent=27 // pred_fallthru
        _
    $region28: #{block_forward.1} parent=5 // pred_fallthru
      _
    %p161 = scmp.le.s32.totalorder 1, %s10
    %p162 = scmp.lt.s32.totalorder %s10, 3
    %p163 = pnand %p161, %p162
    %p164 = pneg %p163
    // Predicated region
    $region33: #{block_forward.1} parent=5 // pred_check
      _
    $region34: #{block_forward.1} parent=5 // pred_check_branch
      %166 = sbr.rel (%p163) target = $region36
    $region35: #{block_forward.1} parent=5 // pred_region
      %s167 = ssub.s32 %s10, 1
      %p168 = scmp.lt.s32.totalorder %s15, 1
      %s169 = scalar_select %p168, %s15, 1
      %s170 = smul.addr %s169, 3
      %s171 = smul.addr %s170, 2
      %s172 = scalar_lea.vmem %s0, %s171
      %p173 = pneg %p36
      %p174 = pneg %p33
      %p175 = pneg %p57
      %p176 = pneg %p54
      %p177 = pneg %p78
      %p178 = pneg %p75
      %p179 = pneg %p99
      %p180 = pneg %p96
      %p181 = pneg %p125
      %p182 = pneg %p122
      %p183 = scmp.lt.s32.totalorder %s15, 1
      %s184 = scalar_select %p183, %s15, 1
      %s185 = smul.addr %s184, 3
      %s186 = smul.addr %s185, 8
      %s187 = scalar_lea.vmem %s4, %s186
      %p188 = scmp.lt.s32.totalorder %s15, 1
      %s189 = scalar_select %p188, %s15, 1
      %s190 = smul.addr %s189, 3
      %s191 = smul.addr %s190, 2
      %s192 = scalar_lea.vmem %s0, %s191
      %p193 = scmp.lt.s32.totalorder %s15, 1
      %s194 = scalar_select %p193, %s15, 1
      %s195 = smul.addr %s194, 3
      %s196 = smul.addr %s195, 8
      %s197 = scalar_lea.vmem %s4, %s196
      %v199 = vld [vmem:[%s192] sm:$0x3f]
      %v200 = vld [vmem:[%s1] sm:$0xf]
      %s201 = scalar_lea.vmem %s1, 4
      %v202 = vld [vmem:[%s201] sm:$0xf]
      %204 = vst [vmem:[#allocation1] ss:$4 sm:$0xff] %v199
      %v205 = vld.sshfl [vmem:[#allocation1] sm:$0xff pattern:$0x73625140]
      %v207 = vld.sshfl [vmem:[#allocation1 + $0x8] sm:$0xff pattern:$0x73625140]
      %v209 = vld.sshfl [vmem:[#allocation1 + $0x10] sm:$0xff pattern:$0x73625140]
      %211 = vrot.lane.b32.xlu0 %v205, 127
      %v212 = vpop.permute.xlu0 %211
      %213 = vrot.lane.b32.xlu0 %v207, 127
      %v214 = vpop.permute.xlu0 %213
      %215 = vrot.lane.b32.xlu0 %v209, 127
      %v216 = vpop.permute.xlu0 %215
      %vm217 = vcmask 1039360
      %v218 = vsel %vm217, %v212, %v214
      %v219 = vsel %vm217, %v214, %v216
      %vm220 = vcmask 31744
      %v222 = vsel %vm220, %v202, 0
      %vm224 = vcmask 1041408
      %v226 = vsel %vm224, %v218, 0
      %v229 = vsel %vm224, %v219, 0
      %v232 = vsel %vm224, %v216, 0
      %234 = vmatpush.bf16.msra.mxu0 0
      %235 = vmatpush.bf16.msra.mxu0 0
      %236 = vmatpush.bf16.msra.mxu0 0
      %237 = vmatpush.bf16.msra.mxu0 0
      %238 = vmatpush.bf16.msra.mxu0 0
      %239 = vmatpush.bf16.msra.mxu0 0
      %240 = vmatpush.bf16.msra.mxu0 0
      %241 = vmatpush.bf16.msra.mxu0 %v226
      %242 = vmatmul.bf16.gmra.mxu0 %v222
      %v243 = vpop.f32.mrf.mxu0
      %v244 = vadd.f32 0.0, %v243
      %v245 = vpop.f32.mrf.mxu0
      %246 = vdwg.mxu0
      %247 = vmatpush.bf16.msra.mxu0 0
      %248 = vmatpush.bf16.msra.mxu0 0
      %249 = vmatpush.bf16.msra.mxu0 0
      %250 = vmatpush.bf16.msra.mxu0 0
      %251 = vmatpush.bf16.msra.mxu0 0
      %252 = vmatpush.bf16.msra.mxu0 0
      %253 = vmatpush.bf16.msra.mxu0 0
      %254 = vmatpush.bf16.msra.mxu0 %v229
      %255 = vmatmul.bf16.gmra.mxu0 %v222
      %v256 = vpop.f32.mrf.mxu0
      %v257 = vadd.f32 0.0, %v256
      %v258 = vpop.f32.mrf.mxu0
      %259 = vdwg.mxu0
      %260 = vmatpush.bf16.msra.mxu0 0
      %261 = vmatpush.bf16.msra.mxu0 0
      %262 = vmatpush.bf16.msra.mxu0 0
      %263 = vmatpush.bf16.msra.mxu0 0
      %264 = vmatpush.bf16.msra.mxu0 0
      %265 = vmatpush.bf16.msra.mxu0 0
      %266 = vmatpush.bf16.msra.mxu0 0
      %267 = vmatpush.bf16.msra.mxu0 %v232
      %268 = vmatmul.bf16.gmra.mxu0 %v222
      %v269 = vpop.f32.mrf.mxu0
      %v270 = vadd.f32 0.0, %v269
      %v271 = vpop.f32.mrf.mxu0
      %272 = vdwg.mxu0
      %273 = vst [vmem:[#allocation1] ss:$4 sm:$0xff] %v199
      %v274 = vld.sshfl [vmem:[#allocation1] sm:$0xff pattern:$0x73625140]
      %v275 = vld.sshfl [vmem:[#allocation1 + $0x8] sm:$0xff pattern:$0x73625140]
      %v276 = vld.sshfl [vmem:[#allocation1 + $0x10] sm:$0xff pattern:$0x73625140]
      %v278 = vsel %vm220, %v200, 0
      %v280 = vsel %vm224, %v274, 0
      %v282 = vsel %vm224, %v275, 0
      %v284 = vsel %vm224, %v276, 0
      %286 = vmatpush.bf16.msra.mxu0 0
      %287 = vmatpush.bf16.msra.mxu0 0
      %288 = vmatpush.bf16.msra.mxu0 0
      %289 = vmatpush.bf16.msra.mxu0 0
      %290 = vmatpush.bf16.msra.mxu0 0
      %291 = vmatpush.bf16.msra.mxu0 0
      %292 = vmatpush.bf16.msra.mxu0 0
      %293 = vmatpush.bf16.msra.mxu0 %v280
      %294 = vmatmul.bf16.gmra.mxu0 %v278
      %v295 = vpop.f32.mrf.mxu0
      %v296 = vadd.f32 %v244, %v295
      %v297 = vpop.f32.mrf.mxu0
      %298 = vdwg.mxu0
      %299 = vmatpush.bf16.msra.mxu0 0
      %300 = vmatpush.bf16.msra.mxu0 0
      %301 = vmatpush.bf16.msra.mxu0 0
      %302 = vmatpush.bf16.msra.mxu0 0
      %303 = vmatpush.bf16.msra.mxu0 0
      %304 = vmatpush.bf16.msra.mxu0 0
      %305 = vmatpush.bf16.msra.mxu0 0
      %306 = vmatpush.bf16.msra.mxu0 %v282
      %307 = vmatmul.bf16.gmra.mxu0 %v278
      %v308 = vpop.f32.mrf.mxu0
      %v309 = vadd.f32 %v257, %v308
      %v310 = vpop.f32.mrf.mxu0
      %311 = vdwg.mxu0
      %312 = vmatpush.bf16.msra.mxu0 0
      %313 = vmatpush.bf16.msra.mxu0 0
      %314 = vmatpush.bf16.msra.mxu0 0
      %315 = vmatpush.bf16.msra.mxu0 0
      %316 = vmatpush.bf16.msra.mxu0 0
      %317 = vmatpush.bf16.msra.mxu0 0
      %318 = vmatpush.bf16.msra.mxu0 0
      %319 = vmatpush.bf16.msra.mxu0 %v284
      %320 = vmatmul.bf16.gmra.mxu0 %v278
      %v321 = vpop.f32.mrf.mxu0
      %v322 = vadd.f32 %v270, %v321
      %v323 = vpop.f32.mrf.mxu0
      %324 = vdwg.mxu0
      %s325 = scalar_lea.vmem %s1, 8
      %v326 = vld [vmem:[%s325] sm:$0xf]
      %327 = vst [vmem:[#allocation1] ss:$4 sm:$0xff] %v199
      %v328 = vld.sshfl [vmem:[#allocation1] sm:$0xff pattern:$0x73625140]
      %v330 = vld.sshfl [vmem:[#allocation1 + $0x8] sm:$0xff pattern:$0x73625140]
      %v332 = vld.sshfl [vmem:[#allocation1 + $0x10] sm:$0xff pattern:$0x73625140]
      %334 = vrot.lane.b32.xlu0 %v328, 126
      %v335 = vpop.permute.xlu0 %334
      %336 = vrot.lane.b32.xlu0 %v330, 126
      %v337 = vpop.permute.xlu0 %336
      %338 = vrot.lane.b32.xlu0 %v332, 126
      %v339 = vpop.permute.xlu0 %338
      %vm340 = vcmask 1031168
      %v341 = vsel %vm340, %v335, %v337
      %v342 = vsel %vm340, %v337, %v339
      %v344 = vsel %vm220, %v326, 0
      %v347 = vsel %vm224, %v341, 0
      %v350 = vsel %vm224, %v342, 0
      %v353 = vsel %vm224, %v339, 0
      %355 = vmatpush.bf16.msra.mxu0 0
      %356 = vmatpush.bf16.msra.mxu0 0
      %357 = vmatpush.bf16.msra.mxu0 0
      %358 = vmatpush.bf16.msra.mxu0 0
      %359 = vmatpush.bf16.msra.mxu0 0
      %360 = vmatpush.bf16.msra.mxu0 0
      %361 = vmatpush.bf16.msra.mxu0 0
      %362 = vmatpush.bf16.msra.mxu0 %v347
      %363 = vmatmul.bf16.gmra.mxu0 %v344
      %v364 = vpop.f32.mrf.mxu0
      %v365 = vadd.f32 0.0, %v364
      %v366 = vpop.f32.mrf.mxu0
      %367 = vdwg.mxu0
      %368 = vmatpush.bf16.msra.mxu0 0
      %369 = vmatpush.bf16.msra.mxu0 0
      %370 = vmatpush.bf16.msra.mxu0 0
      %371 = vmatpush.bf16.msra.mxu0 0
      %372 = vmatpush.bf16.msra.mxu0 0
      %373 = vmatpush.bf16.msra.mxu0 0
      %374 = vmatpush.bf16.msra.mxu0 0
      %375 = vmatpush.bf16.msra.mxu0 %v350
      %376 = vmatmul.bf16.gmra.mxu0 %v344
      %v377 = vpop.f32.mrf.mxu0
      %v378 = vadd.f32 0.0, %v377
      %v379 = vpop.f32.mrf.mxu0
      %380 = vdwg.mxu0
      %381 = vmatpush.bf16.msra.mxu0 0
      %382 = vmatpush.bf16.msra.mxu0 0
      %383 = vmatpush.bf16.msra.mxu0 0
      %384 = vmatpush.bf16.msra.mxu0 0
      %385 = vmatpush.bf16.msra.mxu0 0
      %386 = vmatpush.bf16.msra.mxu0 0
      %387 = vmatpush.bf16.msra.mxu0 0
      %388 = vmatpush.bf16.msra.mxu0 %v353
      %389 = vmatmul.bf16.gmra.mxu0 %v344
      %v390 = vpop.f32.mrf.mxu0
      %v391 = vadd.f32 0.0, %v390
      %v392 = vpop.f32.mrf.mxu0
      %393 = vdwg.mxu0
      %v394 = vadd.f32 %v296, %v365
      %v395 = vadd.f32 %v309, %v378
      %v396 = vadd.f32 %v322, %v391
      %s397 = scalar_lea.vmem %s1, 12
      %v398 = vld [vmem:[%s397] sm:$0xf]
      %399 = vst [vmem:[#allocation1] ss:$4 sm:$0xff] %v199
      %v400 = vld.sshfl [vmem:[#allocation1] sm:$0xff pattern:$0x73625140]
      %v402 = vld.sshfl [vmem:[#allocation1 + $0x8] sm:$0xff pattern:$0x73625140]
      %v404 = vld.sshfl [vmem:[#allocation1 + $0x10] sm:$0xff pattern:$0x73625140]
      %406 = vrot.lane.b32.xlu0 %v400, 110
      %v407 = vpop.permute.xlu0 %406
      %408 = vrot.lane.b32.xlu0 %v402, 110
      %v409 = vpop.permute.xlu0 %408
      %410 = vrot.lane.b32.xlu0 %v404, 110
      %v411 = vpop.permute.xlu0 %410
      %vm412 = vcmask 900096
      %v413 = vsel %vm412, %v407, %v409
      %v414 = vsel %vm412, %v409, %v411
      %v416 = vsel %vm220, %v398, 0
      %v419 = vsel %vm224, %v413, 0
      %v422 = vsel %vm224, %v414, 0
      %v425 = vsel %vm224, %v411, 0
      %427 = vmatpush.bf16.msra.mxu0 0
      %428 = vmatpush.bf16.msra.mxu0 0
      %429 = vmatpush.bf16.msra.mxu0 0
      %430 = vmatpush.bf16.msra.mxu0 0
      %431 = vmatpush.bf16.msra.mxu0 0
      %432 = vmatpush.bf16.msra.mxu0 0
      %433 = vmatpush.bf16.msra.mxu0 0
      %434 = vmatpush.bf16.msra.mxu0 %v419
      %435 = vmatmul.bf16.gmra.mxu0 %v416
      %v436 = vpop.f32.mrf.mxu0
      %v437 = vadd.f32 0.0, %v436
      %v438 = vpop.f32.mrf.mxu0
      %439 = vdwg.mxu0
      %440 = vmatpush.bf16.msra.mxu0 0
      %441 = vmatpush.bf16.msra.mxu0 0
      %442 = vmatpush.bf16.msra.mxu0 0
      %443 = vmatpush.bf16.msra.mxu0 0
      %444 = vmatpush.bf16.msra.mxu0 0
      %445 = vmatpush.bf16.msra.mxu0 0
      %446 = vmatpush.bf16.msra.mxu0 0
      %447 = vmatpush.bf16.msra.mxu0 %v422
      %448 = vmatmul.bf16.gmra.mxu0 %v416
      %v449 = vpop.f32.mrf.mxu0
      %v450 = vadd.f32 0.0, %v449
      %v451 = vpop.f32.mrf.mxu0
      %452 = vdwg.mxu0
      %453 = vmatpush.bf16.msra.mxu0 0
      %454 = vmatpush.bf16.msra.mxu0 0
      %455 = vmatpush.bf16.msra.mxu0 0
      %456 = vmatpush.bf16.msra.mxu0 0
      %457 = vmatpush.bf16.msra.mxu0 0
      %458 = vmatpush.bf16.msra.mxu0 0
      %459 = vmatpush.bf16.msra.mxu0 0
      %460 = vmatpush.bf16.msra.mxu0 %v425
      %461 = vmatmul.bf16.gmra.mxu0 %v416
      %v462 = vpop.f32.mrf.mxu0
      %v463 = vadd.f32 0.0, %v462
      %v464 = vpop.f32.mrf.mxu0
      %465 = vdwg.mxu0
      %v466 = vadd.f32 %v394, %v437
      %v467 = vadd.f32 %v395, %v450
      %v468 = vadd.f32 %v396, %v463
      %s469 = scalar_lea.vmem %s1, 16
      %v470 = vld [vmem:[%s469] sm:$0xf]
      %471 = vst [vmem:[#allocation1] ss:$4 sm:$0xff] %v199
      %v472 = vld.sshfl [vmem:[#allocation1] sm:$0xff pattern:$0x73625140]
      %v474 = vld.sshfl [vmem:[#allocation1 + $0x8] sm:$0xff pattern:$0x73625140]
      %v476 = vld.sshfl [vmem:[#allocation1 + $0x10] sm:$0xff pattern:$0x73625140]
      %478 = vrot.lane.b32.xlu0 %v472, 109
      %v479 = vpop.permute.xlu0 %478
      %480 = vrot.lane.b32.xlu0 %v474, 109
      %v481 = vpop.permute.xlu0 %480
      %482 = vrot.lane.b32.xlu0 %v476, 109
      %v483 = vpop.permute.xlu0 %482
      %vm484 = vcmask 891904
      %v485 = vsel %vm484, %v479, %v481
      %v486 = vsel %vm484, %v481, %v483
      %v488 = vsel %vm220, %v470, 0
      %v491 = vsel %vm224, %v485, 0
      %v494 = vsel %vm224, %v486, 0
      %v497 = vsel %vm224, %v483, 0
      %499 = vmatpush.bf16.msra.mxu0 0
      %500 = vmatpush.bf16.msra.mxu0 0
      %501 = vmatpush.bf16.msra.mxu0 0
      %502 = vmatpush.bf16.msra.mxu0 0
      %503 = vmatpush.bf16.msra.mxu0 0
      %504 = vmatpush.bf16.msra.mxu0 0
      %505 = vmatpush.bf16.msra.mxu0 0
      %506 = vmatpush.bf16.msra.mxu0 %v491
      %507 = vmatmul.bf16.gmra.mxu0 %v488
      %v508 = vpop.f32.mrf.mxu0
      %v509 = vadd.f32 0.0, %v508
      %v510 = vpop.f32.mrf.mxu0
      %511 = vdwg.mxu0
      %512 = vmatpush.bf16.msra.mxu0 0
      %513 = vmatpush.bf16.msra.mxu0 0
      %514 = vmatpush.bf16.msra.mxu0 0
      %515 = vmatpush.bf16.msra.mxu0 0
      %516 = vmatpush.bf16.msra.mxu0 0
      %517 = vmatpush.bf16.msra.mxu0 0
      %518 = vmatpush.bf16.msra.mxu0 0
      %519 = vmatpush.bf16.msra.mxu0 %v494
      %520 = vmatmul.bf16.gmra.mxu0 %v488
      %v521 = vpop.f32.mrf.mxu0
      %v522 = vadd.f32 0.0, %v521
      %v523 = vpop.f32.mrf.mxu0
      %524 = vdwg.mxu0
      %525 = vmatpush.bf16.msra.mxu0 0
      %526 = vmatpush.bf16.msra.mxu0 0
      %527 = vmatpush.bf16.msra.mxu0 0
      %528 = vmatpush.bf16.msra.mxu0 0
      %529 = vmatpush.bf16.msra.mxu0 0
      %530 = vmatpush.bf16.msra.mxu0 0
      %531 = vmatpush.bf16.msra.mxu0 0
      %532 = vmatpush.bf16.msra.mxu0 %v497
      %533 = vmatmul.bf16.gmra.mxu0 %v488
      %v534 = vpop.f32.mrf.mxu0
      %v535 = vadd.f32 0.0, %v534
      %v536 = vpop.f32.mrf.mxu0
      %537 = vdwg.mxu0
      %v538 = vadd.f32 %v466, %v509
      %v539 = vadd.f32 %v467, %v522
      %v540 = vadd.f32 %v468, %v535
      %s541 = scalar_lea.vmem %s1, 20
      %v542 = vld [vmem:[%s541] sm:$0xf]
      %543 = vst [vmem:[#allocation1] ss:$4 sm:$0xff] %v199
      %v544 = vld.sshfl [vmem:[#allocation1] sm:$0xff pattern:$0x73625140]
      %v546 = vld.sshfl [vmem:[#allocation1 + $0x8] sm:$0xff pattern:$0x73625140]
      %v548 = vld.sshfl [vmem:[#allocation1 + $0x10] sm:$0xff pattern:$0x73625140]
      %550 = vrot.lane.b32.xlu0 %v544, 108
      %v551 = vpop.permute.xlu0 %550
      %552 = vrot.lane.b32.xlu0 %v546, 108
      %v553 = vpop.permute.xlu0 %552
      %554 = vrot.lane.b32.xlu0 %v548, 108
      %v555 = vpop.permute.xlu0 %554
      %vm556 = vcmask 883712
      %v557 = vsel %vm556, %v551, %v553
      %v558 = vsel %vm556, %v553, %v555
      %v560 = vsel %vm220, %v542, 0
      %v563 = vsel %vm224, %v557, 0
      %v566 = vsel %vm224, %v558, 0
      %v569 = vsel %vm224, %v555, 0
      %571 = vmatpush.bf16.msra.mxu0 0
      %572 = vmatpush.bf16.msra.mxu0 0
      %573 = vmatpush.bf16.msra.mxu0 0
      %574 = vmatpush.bf16.msra.mxu0 0
      %575 = vmatpush.bf16.msra.mxu0 0
      %576 = vmatpush.bf16.msra.mxu0 0
      %577 = vmatpush.bf16.msra.mxu0 0
      %578 = vmatpush.bf16.msra.mxu0 %v563
      %579 = vmatmul.bf16.gmra.mxu0 %v560
      %v580 = vpop.f32.mrf.mxu0
      %v581 = vadd.f32 0.0, %v580
      %v582 = vpop.f32.mrf.mxu0
      %583 = vdwg.mxu0
      %584 = vmatpush.bf16.msra.mxu0 0
      %585 = vmatpush.bf16.msra.mxu0 0
      %586 = vmatpush.bf16.msra.mxu0 0
      %587 = vmatpush.bf16.msra.mxu0 0
      %588 = vmatpush.bf16.msra.mxu0 0
      %589 = vmatpush.bf16.msra.mxu0 0
      %590 = vmatpush.bf16.msra.mxu0 0
      %591 = vmatpush.bf16.msra.mxu0 %v566
      %592 = vmatmul.bf16.gmra.mxu0 %v560
      %v593 = vpop.f32.mrf.mxu0
      %v594 = vadd.f32 0.0, %v593
      %v595 = vpop.f32.mrf.mxu0
      %596 = vdwg.mxu0
      %597 = vmatpush.bf16.msra.mxu0 0
      %598 = vmatpush.bf16.msra.mxu0 0
      %599 = vmatpush.bf16.msra.mxu0 0
      %600 = vmatpush.bf16.msra.mxu0 0
      %601 = vmatpush.bf16.msra.mxu0 0
      %602 = vmatpush.bf16.msra.mxu0 0
      %603 = vmatpush.bf16.msra.mxu0 0
      %604 = vmatpush.bf16.msra.mxu0 %v569
      %605 = vmatmul.bf16.gmra.mxu0 %v560
      %v606 = vpop.f32.mrf.mxu0
      %v607 = vadd.f32 0.0, %v606
      %v608 = vpop.f32.mrf.mxu0
      %609 = vdwg.mxu0
      %v610 = vadd.f32 %v538, %v581
      %v611 = vadd.f32 %v539, %v594
      %v612 = vadd.f32 %v540, %v607
      %s613 = scalar_lea.vmem %s1, 24
      %v614 = vld [vmem:[%s613] sm:$0xf]
      %615 = vst [vmem:[#allocation1] ss:$4 sm:$0xff] %v199
      %v616 = vld.sshfl [vmem:[#allocation1] sm:$0xff pattern:$0x73625140]
      %v618 = vld.sshfl [vmem:[#allocation1 + $0x8] sm:$0xff pattern:$0x73625140]
      %v620 = vld.sshfl [vmem:[#allocation1 + $0x10] sm:$0xff pattern:$0x73625140]
      %622 = vrot.lane.b32.xlu0 %v616, 92
      %v623 = vpop.permute.xlu0 %622
      %624 = vrot.lane.b32.xlu0 %v618, 92
      %v625 = vpop.permute.xlu0 %624
      %626 = vrot.lane.b32.xlu0 %v620, 92
      %v627 = vpop.permute.xlu0 %626
      %vm628 = vcmask 752640
      %v629 = vsel %vm628, %v623, %v625
      %v630 = vsel %vm628, %v625, %v627
      %v632 = vsel %vm220, %v614, 0
      %v635 = vsel %vm224, %v629, 0
      %v638 = vsel %vm224, %v630, 0
      %v641 = vsel %vm224, %v627, 0
      %643 = vmatpush.bf16.msra.mxu0 0
      %644 = vmatpush.bf16.msra.mxu0 0
      %645 = vmatpush.bf16.msra.mxu0 0
      %646 = vmatpush.bf16.msra.mxu0 0
      %647 = vmatpush.bf16.msra.mxu0 0
      %648 = vmatpush.bf16.msra.mxu0 0
      %649 = vmatpush.bf16.msra.mxu0 0
      %650 = vmatpush.bf16.msra.mxu0 %v635
      %651 = vmatmul.bf16.gmra.mxu0 %v632
      %v652 = vpop.f32.mrf.mxu0
      %v653 = vadd.f32 0.0, %v652
      %v654 = vpop.f32.mrf.mxu0
      %655 = vdwg.mxu0
      %656 = vmatpush.bf16.msra.mxu0 0
      %657 = vmatpush.bf16.msra.mxu0 0
      %658 = vmatpush.bf16.msra.mxu0 0
      %659 = vmatpush.bf16.msra.mxu0 0
      %660 = vmatpush.bf16.msra.mxu0 0
      %661 = vmatpush.bf16.msra.mxu0 0
      %662 = vmatpush.bf16.msra.mxu0 0
      %663 = vmatpush.bf16.msra.mxu0 %v638
      %664 = vmatmul.bf16.gmra.mxu0 %v632
      %v665 = vpop.f32.mrf.mxu0
      %v666 = vadd.f32 0.0, %v665
      %v667 = vpop.f32.mrf.mxu0
      %668 = vdwg.mxu0
      %669 = vmatpush.bf16.msra.mxu0 0
      %670 = vmatpush.bf16.msra.mxu0 0
      %671 = vmatpush.bf16.msra.mxu0 0
      %672 = vmatpush.bf16.msra.mxu0 0
      %673 = vmatpush.bf16.msra.mxu0 0
      %674 = vmatpush.bf16.msra.mxu0 0
      %675 = vmatpush.bf16.msra.mxu0 0
      %676 = vmatpush.bf16.msra.mxu0 %v641
      %677 = vmatmul.bf16.gmra.mxu0 %v632
      %v678 = vpop.f32.mrf.mxu0
      %v679 = vadd.f32 0.0, %v678
      %v680 = vpop.f32.mrf.mxu0
      %681 = vdwg.mxu0
      %v682 = vadd.f32 %v610, %v653
      %v683 = vadd.f32 %v611, %v666
      %v684 = vadd.f32 %v612, %v679
      %s685 = scalar_lea.vmem %s1, 28
      %v686 = vld [vmem:[%s685] sm:$0xf]
      %687 = vst [vmem:[#allocation1] ss:$4 sm:$0xff] %v199
      %v688 = vld.sshfl [vmem:[#allocation1] sm:$0xff pattern:$0x73625140]
      %v690 = vld.sshfl [vmem:[#allocation1 + $0x8] sm:$0xff pattern:$0x73625140]
      %v692 = vld.sshfl [vmem:[#allocation1 + $0x10] sm:$0xff pattern:$0x73625140]
      %694 = vrot.lane.b32.xlu0 %v688, 91
      %v695 = vpop.permute.xlu0 %694
      %696 = vrot.lane.b32.xlu0 %v690, 91
      %v697 = vpop.permute.xlu0 %696
      %698 = vrot.lane.b32.xlu0 %v692, 91
      %v699 = vpop.permute.xlu0 %698
      %vm700 = vcmask 744448
      %v701 = vsel %vm700, %v695, %v697
      %v702 = vsel %vm700, %v697, %v699
      %v704 = vsel %vm220, %v686, 0
      %v707 = vsel %vm224, %v701, 0
      %v710 = vsel %vm224, %v702, 0
      %v713 = vsel %vm224, %v699, 0
      %715 = vmatpush.bf16.msra.mxu0 0
      %716 = vmatpush.bf16.msra.mxu0 0
      %717 = vmatpush.bf16.msra.mxu0 0
      %718 = vmatpush.bf16.msra.mxu0 0
      %719 = vmatpush.bf16.msra.mxu0 0
      %720 = vmatpush.bf16.msra.mxu0 0
      %721 = vmatpush.bf16.msra.mxu0 0
      %722 = vmatpush.bf16.msra.mxu0 %v707
      %723 = vmatmul.bf16.gmra.mxu0 %v704
      %v724 = vpop.f32.mrf.mxu0
      %v725 = vadd.f32 0.0, %v724
      %v726 = vpop.f32.mrf.mxu0
      %727 = vdwg.mxu0
      %728 = vmatpush.bf16.msra.mxu0 0
      %729 = vmatpush.bf16.msra.mxu0 0
      %730 = vmatpush.bf16.msra.mxu0 0
      %731 = vmatpush.bf16.msra.mxu0 0
      %732 = vmatpush.bf16.msra.mxu0 0
      %733 = vmatpush.bf16.msra.mxu0 0
      %734 = vmatpush.bf16.msra.mxu0 0
      %735 = vmatpush.bf16.msra.mxu0 %v710
      %736 = vmatmul.bf16.gmra.mxu0 %v704
      %v737 = vpop.f32.mrf.mxu0
      %v738 = vadd.f32 0.0, %v737
      %v739 = vpop.f32.mrf.mxu0
      %740 = vdwg.mxu0
      %741 = vmatpush.bf16.msra.mxu0 0
      %742 = vmatpush.bf16.msra.mxu0 0
      %743 = vmatpush.bf16.msra.mxu0 0
      %744 = vmatpush.bf16.msra.mxu0 0
      %745 = vmatpush.bf16.msra.mxu0 0
      %746 = vmatpush.bf16.msra.mxu0 0
      %747 = vmatpush.bf16.msra.mxu0 0
      %748 = vmatpush.bf16.msra.mxu0 %v713
      %749 = vmatmul.bf16.gmra.mxu0 %v704
      %v750 = vpop.f32.mrf.mxu0
      %v751 = vadd.f32 0.0, %v750
      %v752 = vpop.f32.mrf.mxu0
      %753 = vdwg.mxu0
      %v754 = vadd.f32 %v682, %v725
      %v755 = vadd.f32 %v683, %v738
      %v756 = vadd.f32 %v684, %v751
      %s757 = scalar_lea.vmem %s1, 32
      %v758 = vld [vmem:[%s757] sm:$0xf]
      %759 = vst [vmem:[#allocation1] ss:$4 sm:$0xff] %v199
      %v760 = vld.sshfl [vmem:[#allocation1] sm:$0xff pattern:$0x73625140]
      %v762 = vld.sshfl [vmem:[#allocation1 + $0x8] sm:$0xff pattern:$0x73625140]
      %v764 = vld.sshfl [vmem:[#allocation1 + $0x10] sm:$0xff pattern:$0x73625140]
      %766 = vrot.lane.b32.xlu0 %v760, 90
      %v767 = vpop.permute.xlu0 %766
      %768 = vrot.lane.b32.xlu0 %v762, 90
      %v769 = vpop.permute.xlu0 %768
      %770 = vrot.lane.b32.xlu0 %v764, 90
      %v771 = vpop.permute.xlu0 %770
      %vm772 = vcmask 736256
      %v773 = vsel %vm772, %v767, %v769
      %v774 = vsel %vm772, %v769, %v771
      %v776 = vsel %vm220, %v758, 0
      %v779 = vsel %vm224, %v773, 0
      %v782 = vsel %vm224, %v774, 0
      %v785 = vsel %vm224, %v771, 0
      %787 = vmatpush.bf16.msra.mxu0 0
      %788 = vmatpush.bf16.msra.mxu0 0
      %789 = vmatpush.bf16.msra.mxu0 0
      %790 = vmatpush.bf16.msra.mxu0 0
      %791 = vmatpush.bf16.msra.mxu0 0
      %792 = vmatpush.bf16.msra.mxu0 0
      %793 = vmatpush.bf16.msra.mxu0 0
      %794 = vmatpush.bf16.msra.mxu0 %v779
      %795 = vmatmul.bf16.gmra.mxu0 %v776
      %v796 = vpop.f32.mrf.mxu0
      %v797 = vadd.f32 0.0, %v796
      %v798 = vpop.f32.mrf.mxu0
      %799 = vdwg.mxu0
      %800 = vmatpush.bf16.msra.mxu0 0
      %801 = vmatpush.bf16.msra.mxu0 0
      %802 = vmatpush.bf16.msra.mxu0 0
      %803 = vmatpush.bf16.msra.mxu0 0
      %804 = vmatpush.bf16.msra.mxu0 0
      %805 = vmatpush.bf16.msra.mxu0 0
      %806 = vmatpush.bf16.msra.mxu0 0
      %807 = vmatpush.bf16.msra.mxu0 %v782
      %808 = vmatmul.bf16.gmra.mxu0 %v776
      %v809 = vpop.f32.mrf.mxu0
      %v810 = vadd.f32 0.0, %v809
      %v811 = vpop.f32.mrf.mxu0
      %812 = vdwg.mxu0
      %813 = vmatpush.bf16.msra.mxu0 0
      %814 = vmatpush.bf16.msra.mxu0 0
      %815 = vmatpush.bf16.msra.mxu0 0
      %816 = vmatpush.bf16.msra.mxu0 0
      %817 = vmatpush.bf16.msra.mxu0 0
      %818 = vmatpush.bf16.msra.mxu0 0
      %819 = vmatpush.bf16.msra.mxu0 0
      %820 = vmatpush.bf16.msra.mxu0 %v785
      %821 = vmatmul.bf16.gmra.mxu0 %v776
      %v822 = vpop.f32.mrf.mxu0
      %v823 = vadd.f32 0.0, %v822
      %v824 = vpop.f32.mrf.mxu0
      %825 = vdwg.mxu0
      %v826 = vadd.f32 %v754, %v797
      %v827 = vadd.f32 %v755, %v810
      %v828 = vadd.f32 %v756, %v823
      %v829 = vld [vmem:[%s2] sm:$0xff]
      %831 = vset.pattern.permute.xlu0 0
      %832 = vperm.xlu0 %831, %v829
      %v833 = vpop.permute.xlu0 %832
      %v835 = vadd.f32 %v826, %v833
      %v836 = vadd.f32 %v827, %v833
      %v837 = vadd.f32 %v828, %v833
      %v838 = vmul.f32 %v835, %v835
      %v839 = vmul.f32 %v836, %v836
      %v840 = vmul.f32 %v837, %v837
      %v841 = vrot.slane %v838, 4
      %v842 = vadd.f32 %v838, %v841
      %v843 = vrot.slane %v842, 2
      %v844 = vadd.f32 %v842, %v843
      %v845 = vrot.slane %v844, 1
      %v846 = vadd.f32 %v844, %v845
      %v847 = vrot.slane %v839, 4
      %v848 = vadd.f32 %v839, %v847
      %v849 = vrot.slane %v848, 2
      %v850 = vadd.f32 %v848, %v849
      %v851 = vrot.slane %v850, 1
      %v852 = vadd.f32 %v850, %v851
      %vm853 = vcmask 261120
      %v854 = vsel %vm853, %v840, 0.0
      %v855 = vrot.slane %v854, 4
      %v856 = vadd.f32 %v854, %v855
      %v857 = vrot.slane %v856, 2
      %v858 = vadd.f32 %v856, %v857
      %v859 = vrot.slane %v858, 1
      %v860 = vadd.f32 %v858, %v859
      %v861 = vmax.f32 %v846, 1e-24
      %v862 = vmax.f32 %v852, 1e-24
      %v863 = vmax.f32 %v860, 1e-24
      %v864 = vrsqrt.pop %v861
      %v865 = vmul.f32 %v864, %v861
      %v866 = vmul.f32 %v865, %v864
      %v867 = vmul.f32 0.5, %v866
      %v868 = vsub.f32 1.5, %v867
      %v869 = vmul.f32 %v864, %v868
      %vm870 = vweird.f32 %v861
      %vm871 = vweird.f32 %v864
      %vm872 = vmor %vm870, %vm871
      %v873 = vsel %vm872, %v864, %v869
      %v874 = vrsqrt.pop %v862
      %v875 = vmul.f32 %v874, %v862
      %v876 = vmul.f32 %v875, %v874
      %v877 = vmul.f32 0.5, %v876
      %v878 = vsub.f32 1.5, %v877
      %v879 = vmul.f32 %v874, %v878
      %vm880 = vweird.f32 %v862
      %vm881 = vweird.f32 %v874
      %vm882 = vmor %vm880, %vm881
      %v883 = vsel %vm882, %v874, %v879
      %v884 = vrsqrt.pop %v863
      %v885 = vmul.f32 %v884, %v863
      %v886 = vmul.f32 %v885, %v884
      %v887 = vmul.f32 0.5, %v886
      %v888 = vsub.f32 1.5, %v887
      %v889 = vmul.f32 %v884, %v888
      %vm890 = vweird.f32 %v863
      %vm891 = vweird.f32 %v884
      %vm892 = vmor %vm890, %vm891
      %v893 = vsel %vm892, %v884, %v889
      %v894 = vmul.f32 %v835, %v873
      %v895 = vmul.f32 %v836, %v883
      %v896 = vmul.f32 %v837, %v893
      %v897 = vld [vmem:[%s3] sm:$0xff]
      %899 = vset.pattern.permute.xlu0 0
      %900 = vperm.xlu0 %899, %v897
      %v901 = vpop.permute.xlu0 %900
      %v903 = vmul.f32 %v894, %v901
      %v904 = vmul.f32 %v895, %v901
      %v905 = vmul.f32 %v896, %v901
      %v906 = vxor.u32 %v903, 2147483648
      %v907 = vxor.u32 %v904, 2147483648
      %v908 = vxor.u32 %v905, 2147483648
      %v909 = vmul.f32 %v906, 1.442695
      %v910 = vpow.pop %v909
      %v911 = vmul.f32 %v907, 1.442695
      %v912 = vpow.pop %v911
      %v913 = vmul.f32 %v908, 1.442695
      %v914 = vpow.pop %v913
      %v915 = vadd.f32 %v910, 1.0
      %v916 = vadd.f32 %v912, 1.0
      %v917 = vadd.f32 %v914, 1.0
      %v918 = vrcp.pop %v915
      %v919 = vmul.f32 %v915, %v918
      %v920 = vsub.f32 1.0, %v919
      %v921 = vmul.f32 %v918, %v920
      %v922 = vadd.f32 %v918, %v921
      %vm923 = vweird.f32 %v915
      %vm924 = vweird.f32 %v918
      %vm925 = vmor %vm923, %vm924
      %v926 = vsel %vm925, %v918, %v922
      %v927 = vand.u32 2147483647, %v915
      %vm928 = vcmp.eq.f32.partialorder %v927, 8.507059e+37
      %v929 = vand.u32 %v915, 2147483648
      %v930 = vor.u32 1.1754944e-38, %v929
      %v931 = vsel %vm928, %v930, %v926
      %v932 = vmul.f32 1.0, %v931
      %v933 = vrcp.pop %v916
      %v934 = vmul.f32 %v916, %v933
      %v935 = vsub.f32 1.0, %v934
      %v936 = vmul.f32 %v933, %v935
      %v937 = vadd.f32 %v933, %v936
      %vm938 = vweird.f32 %v916
      %vm939 = vweird.f32 %v933
      %vm940 = vmor %vm938, %vm939
      %v941 = vsel %vm940, %v933, %v937
      %v942 = vand.u32 2147483647, %v916
      %vm943 = vcmp.eq.f32.partialorder %v942, 8.507059e+37
      %v944 = vand.u32 %v916, 2147483648
      %v945 = vor.u32 1.1754944e-38, %v944
      %v946 = vsel %vm943, %v945, %v941
      %v947 = vmul.f32 1.0, %v946
      %v948 = vrcp.pop %v917
      %v949 = vmul.f32 %v917, %v948
      %v950 = vsub.f32 1.0, %v949
      %v951 = vmul.f32 %v948, %v950
      %v952 = vadd.f32 %v948, %v951
      %vm953 = vweird.f32 %v917
      %vm954 = vweird.f32 %v948
      %vm955 = vmor %vm953, %vm954
      %v956 = vsel %vm955, %v948, %v952
      %v957 = vand.u32 2147483647, %v917
      %vm958 = vcmp.eq.f32.partialorder %v957, 8.507059e+37
      %v959 = vand.u32 %v917, 2147483648
      %v960 = vor.u32 1.1754944e-38, %v959
      %v961 = vsel %vm958, %v960, %v956
      %v962 = vmul.f32 1.0, %v961
      %v963 = vmul.f32 %v903, %v932
      %v964 = vmul.f32 %v904, %v947
      %v965 = vmul.f32 %v905, %v962
      %966 = vst [vmem:[%s197] sm:$0xff] %v963
      %967 = vst [vmem:[%s197 + $0x8] sm:$0xff] %v964
      %968 = vst.msk [vmem:[%s197 + $0x10] sm:$0xff] %vm853, %v965
      %p969 = scmp.lt.s32.totalorder %s15, 1
      %s970 = scalar_select %p969, %s15, 1
      %s971 = smul.addr %s970, 3
      %s972 = smul.addr %s971, 8
      %s973 = scalar_lea.vmem %s4, %s972
      // Predicated region
      $region37: #{block_forward.1} parent=35 // pred_check
        %p974 = pneg %p122
      $region38: #{block_forward.1} parent=35 // pred_check_branch
        %976 = sbr.rel (%p974) target = $region40
      $region39: #{block_forward.1} parent=35 // pred_region
        _
      $region40: #{block_forward.1} parent=35 // pred_fallthru
        _
    $region36: #{block_forward.1} parent=5 // pred_fallthru
      _
    %p977 = scmp.le.s32.totalorder 2, %s10
    // Predicated region
    $region41: #{block_forward.1} parent=5 // pred_check
      %p978 = pneg %p977
    $region42: #{block_forward.1} parent=5 // pred_check_branch
      %980 = sbr.rel (%p978) target = $region44
    $region43: #{block_forward.1} parent=5 // pred_region
      %s981 = ssub.s32 %s10, 2
      // Predicated region
      $region45: #{block_forward.1} parent=43 // pred_check
        %p982 = pneg %p128
      $region46: #{block_forward.1} parent=43 // pred_check_branch
        %984 = sbr.rel (%p982) target = $region48
      $region47: #{block_forward.1} parent=43 // pred_region
        %p985 = scmp.lt.s32.totalorder %s16, 1
        %s986 = scalar_select %p985, %s16, 1
        %s987 = smul.addr %s986, 3
        %s988 = smul.addr %s987, 8
        %s989 = scalar_lea.vmem %s4, %s988
      $region48: #{block_forward.1} parent=43 // pred_fallthru
        _
    $region44: #{block_forward.1} parent=5 // pred_fallthru
      _
  $region6: #{block_forward.1} parent=0 // loop_footer
    %s14 = sadd.s32 1, %s10
  $region7: #{block_forward.1} parent=0 // loop_footer_branch
    %9 = sbr.rel target = $region3
  $region8: #{block_forward.1} parent=0 // loop_exit
    _

</llo_original>
